<compile_context>
chip_gen: v5e
topology: v5e:2x2
jax: 0.10.0
libtpu: 0.0.40
codegen_flags: <defaults>
</compile_context>

<pallas_src>
import jax
import jax.numpy as jnp
from jax.experimental import pallas as pl
from jax.experimental.pallas import tpu as pltpu

_LANE = 128
_SUBLANE = 8
_MiB = 1024 * 1024

# Tables larger than this (f32 bytes) are routed to the row-gather path.
_ONE_HOT_TABLE_BYTES_MAX = 2 * _MiB


# ---------------------------------------------------------------------------
# Path 1: small frame table -> one-hot matmul on the MXU, tiled over N.
# ---------------------------------------------------------------------------
def _one_hot_kernel(idx_ref, emb_ref, out_ref):
    # idx_ref: (bn, 1) int32, emb_ref: (F, C) f32, out_ref: (bn, C) f32
    f = emb_ref.shape[0]
    idx = idx_ref[...]
    # torch.where(idx < num_frames, idx, 0).
    # NOTE: negative ids (undefined in the reference module) yield an
    # all-zero output row on this path.
    idx = jnp.where(idx < f, idx, jnp.zeros_like(idx))
    frame_ids = jax.lax.broadcasted_iota(jnp.int32, (idx.shape[0], f), 1)
    one_hot = (frame_ids == idx).astype(jnp.float32)        # (bn, F)
    out_ref[...] = jnp.dot(one_hot, emb_ref[...],
                           preferred_element_type=jnp.float32)


def _choose_block_n(n, f, c, vmem_budget_bytes):
    # Per-row VMEM cost of one grid step:
    #   2 * c * 4        double-buffered f32 output tile
    #   2 * 128 * 4      double-buffered (bn, 1) int32 idx tile
    #                    (a last-dim-1 block is lane-padded to 128 in VMEM)
    #   f * 4            materialized (bn, F) one-hot inside the kernel
    per_row = 2 * c * 4 + 2 * _LANE * 4 + f * 4
    table_bytes = 2 * f * c * 4          # table, conservatively double-buffered
    rows = max((vmem_budget_bytes - table_bytes) // per_row, _SUBLANE)
    # Cap at 1024 rows: large enough to hit ~85% of the HBM write roofline,
    # small enough to fit v7x's 64 MiB VMEM and keep the grid multi-step so
    # v7x's two TensorCores both get blocks.
    block_n = int(min(max(n, _SUBLANE), rows, 1024))
    return max(_SUBLANE, (block_n // _SUBLANE) * _SUBLANE)


def _appearance_embedding_one_hot(idx, embedding, block_n=None):
    n = idx.shape[0]
    f, c = embedding.shape
    if block_n is None:
        # 8 MiB working-set budget: safe on v5e/v6e (128 MiB) and v7x (64 MiB).
        block_n = _choose_block_n(n, f, c, vmem_budget_bytes=8 * _MiB)
    block_n = max(_SUBLANE, (int(block_n) // _SUBLANE) * _SUBLANE)

    # Pad N up to a multiple of block_n (pad ids are 0 -> valid row, sliced off).
    n_pad = pl.cdiv(n, block_n) * block_n
    idx2d = jnp.zeros((n_pad, 1), jnp.int32).at[:n, 0].set(idx.astype(jnp.int32))

    needed = (2 * block_n * c * 4          # output tiles
              + 2 * block_n * _LANE * 4    # lane-padded idx tiles
              + 2 * f * c * 4              # table
              + block_n * f * 4)           # in-kernel one-hot
    vmem_limit = int(min(32 * _MiB, max(needed + 2 * _MiB, 8 * _MiB)))

    out = pl.pallas_call(
        _one_hot_kernel,
        out_shape=jax.ShapeDtypeStruct((n_pad, c), jnp.float32),
        grid_spec=pltpu.PrefetchScalarGridSpec(
            num_scalar_prefetch=0,
            grid=(n_pad // block_n,),
            in_specs=[
                pl.BlockSpec((block_n, 1), lambda i: (i, 0)),   # idx block
                # Grid-invariant table (constant index_map -> fetched once).
                pl.BlockSpec((f, c), lambda i: (0, 0)),
            ],
            out_specs=pl.BlockSpec((block_n, c), lambda i: (i, 0)),
        ),
        compiler_params=pltpu.CompilerParams(
            dimension_semantics=("parallel",),
            vmem_limit_bytes=vmem_limit,
        ),
        cost_estimate=pl.CostEstimate(
            flops=2 * n_pad * f * c,
            transcendentals=0,
            bytes_accessed=n_pad * c * 4 + n_pad * 4 + f * c * 4,
        ),
    )(idx2d, embedding)
    return out[:n]


# ---------------------------------------------------------------------------
# Path 2: large frame table -> scalar-prefetch row gather (no MXU, no full
# table load; only the referenced rows ever leave HBM).
# ---------------------------------------------------------------------------
def _gather_kernel(idx_ref, emb_row_ref, out_ref):
    # idx_ref: (N,) int32 in SMEM (consumed by the index_maps, unused here)
    # emb_row_ref: (1, 1, C) -- row idx[i] of the table; out_ref: (1, 1, C)
    del idx_ref
    out_ref[...] = emb_row_ref[...]


def _appearance_embedding_gather(idx, embedding):
    n = idx.shape[0]
    f, c = embedding.shape
    # Clamp out-of-range ids (torch.where semantics) and, defensively,
    # negative ids *before* they drive a DMA index_map.
    # TODO(synk): negative ids are undefined in the reference module; they map
    # to frame 0 on this path (all-zero row on the one-hot path).
    idx = idx.astype(jnp.int32)
    idx = jnp.where((idx >= 0) & (idx < f), idx, jnp.zeros_like(idx))

    # Reshape to (F, 1, C) / (N, 1, C): every BlockSpec's trailing two dims
    # then exactly equal the array dims, satisfying the (8, 128) tiling rule
    # even though each grid step moves a single table row.
    emb3 = embedding.reshape(f, 1, c)

    out = pl.pallas_call(
        _gather_kernel,
        out_shape=jax.ShapeDtypeStruct((n, 1, c), jnp.float32),
        grid_spec=pltpu.PrefetchScalarGridSpec(
            num_scalar_prefetch=1,                       # idx -> SMEM
            grid=(n,),
            in_specs=[
                pl.BlockSpec((1, 1, c), lambda i, idx_ref: (idx_ref[i], 0, 0)),
            ],
            out_specs=pl.BlockSpec((1, 1, c), lambda i, idx_ref: (i, 0, 0)),
        ),
        compiler_params=pltpu.CompilerParams(
            dimension_semantics=("parallel",),
        ),
        cost_estimate=pl.CostEstimate(
            flops=0,
            transcendentals=0,
            bytes_accessed=2 * n * c * 4 + n * 4,
        ),
    )(idx, emb3)
    return out.reshape(n, c)


# ---------------------------------------------------------------------------
# Public entry point.
# ---------------------------------------------------------------------------
def appearance_embedding(idx, embedding, *, block_n=None):
    """NeRF-W appearance-embedding lookup.

    idx: [N] integer frame ids; embedding: [F, C] float32 table -> [N, C] f32.
    Any idx >= F is mapped to frame 0 (matching the module's torch.where).
    """
    f, c = embedding.shape
    table_bytes = f * c * jnp.dtype(embedding.dtype).itemsize
    if table_bytes <= _ONE_HOT_TABLE_BYTES_MAX:
        return _appearance_embedding_one_hot(idx, embedding, block_n)
    return _appearance_embedding_gather(idx, embedding)


if __name__ == "__main__":
    key = jax.random.PRNGKey(0)
    k_emb, k_idx, k_emb2, k_idx2 = jax.random.split(key, 4)

    # --- Small-F case: one-hot MXU path (module-sized example). -------------
    num_frames, num_channels, n_queries = 16, 128, 8
    # Deterministic "normal" init of the embedding table (module's Parameter).
    embedding = jax.random.normal(k_emb, (num_frames, num_channels), jnp.float32)
    # Some indices intentionally >= num_frames to exercise the where() clamp.
    idx = jax.random.randint(k_idx, (n_queries,), 0, num_frames + 4, jnp.int32)

    out = jax.block_until_ready(appearance_embedding(idx, embedding))
    ref = embedding[jnp.where(idx < num_frames, idx, jnp.zeros_like(idx))]
    assert out.shape == (n_queries, num_channels)
    assert jnp.allclose(out, ref, atol=1e-6), "one-hot path mismatch"

    # --- Same path with a multi-step grid (N > block_n, N % block_n != 0). --
    n_big = 40
    idx_big = jax.random.randint(k_idx2, (n_big,), 0, num_frames + 4, jnp.int32)
    out_big = jax.block_until_ready(
        appearance_embedding(idx_big, embedding, block_n=16))
    ref_big = embedding[jnp.where(idx_big < num_frames, idx_big, 0)]
    assert jnp.allclose(out_big, ref_big, atol=1e-6), "tiled path mismatch"

    # --- Large-F escape hatch: scalar-prefetch row gather path. -------------
    f_large, c_large = 24, 128
    emb_large = jax.random.normal(k_emb2, (f_large, c_large), jnp.float32)
    idx_large = jax.random.randint(k_idx, (6,), 0, f_large + 3, jnp.int32)
    out_g = jax.block_until_ready(
        _appearance_embedding_gather(idx_large, emb_large))
    ref_g = emb_large[jnp.where(idx_large < f_large, idx_large, 0)]
    assert jnp.allclose(out_g, ref_g, atol=1e-6), "gather path mismatch"

    print("KERNEL_OK")
</pallas_src>

<mosaic_0001>
module attributes {stable_mosaic.version = 11 : i64} {
  func.func @_one_hot_kernel(%arg0: i32, %arg1: memref<8x1xi32, #tpu.memory_space<vmem>>, %arg2: memref<16x128xf32, #tpu.memory_space<vmem>>, %arg3: memref<8x128xf32, #tpu.memory_space<vmem>>) attributes {dimension_semantics = [#tpu.dimension_semantics<parallel>], iteration_bounds = array<i64: 1>, scalar_prefetch = 0 : i64, scratch_operands = 0 : i64, tpu.core_type = #tpu.core_type<tc>, window_params = [{transform_indices = @transform_0, window_bounds = array<i64: 8, 1>}, {pipeline_mode = #tpu.pipeline_mode<synchronous>, transform_indices = @transform_1, window_bounds = array<i64: 16, 128>}, {transform_indices = @transform_2, window_bounds = array<i64: 8, 128>}]} {
    %c0 = arith.constant 0 : index
    %c0_0 = arith.constant 0 : index
    %0 = vector.load %arg1[%c0, %c0_0] : memref<8x1xi32, #tpu.memory_space<vmem>>, vector<8x1xi32>
    %c16_i32 = arith.constant 16 : i32
    %1 = vector.broadcast %c16_i32 : i32 to vector<8x1xi32>
    %2 = arith.cmpi slt, %0, %1 : vector<8x1xi32>
    %c0_i32 = arith.constant 0 : i32
    %3 = vector.broadcast %c0_i32 : i32 to vector<8x1xi32>
    %4 = arith.select %2, %0, %3 : vector<8x1xi1>, vector<8x1xi32>
    %5 = tpu.iota {dimensions = array<i32: 1>} : vector<8x16xi32>
    %6 = vector.broadcast %4 : vector<8x1xi32> to vector<8x16xi32>
    %7 = arith.cmpi eq, %5, %6 : vector<8x16xi32>
    %8 = arith.extui %7 : vector<8x16xi1> to vector<8x16xi32>
    %9 = arith.sitofp %8 : vector<8x16xi32> to vector<8x16xf32>
    %c0_1 = arith.constant 0 : index
    %c0_2 = arith.constant 0 : index
    %10 = vector.load %arg2[%c0_1, %c0_2] : memref<16x128xf32, #tpu.memory_space<vmem>>, vector<16x128xf32>
    %cst = arith.constant dense<0.000000e+00> : vector<8x128xf32>
    %11 = tpu.matmul %9, %10, %cst {dimension_numbers = #tpu.dot_dimension_numbers<[1], [0], [0], [1], [0, 0, 1, 1], [], []>} : vector<8x16xf32>, vector<16x128xf32>, vector<8x128xf32> -> vector<8x128xf32>
    %c0_3 = arith.constant 0 : index
    %c0_4 = arith.constant 0 : index
    %12 = vector.load %arg3[%c0_3, %c0_4] : memref<8x128xf32, #tpu.memory_space<vmem>>, vector<8x128xf32>
    tpu.vector_store %arg3[%c0_3, %c0_4], %11 {strides = array<i32>} : memref<8x128xf32, #tpu.memory_space<vmem>>, vector<8x128xf32>,
    return
  }
  func.func @transform_0(%arg0: i32) -> (i32, i32) {
    %c0_i32 = arith.constant 0 : i32
    %c0_i32_0 = arith.constant 0 : i32
    return %arg0, %c0_i32 : i32, i32
  }
  func.func @transform_1(%arg0: i32) -> (i32, i32) {
    %c0_i32 = arith.constant 0 : i32
    %c0_i32_0 = arith.constant 0 : i32
    %c0_i32_1 = arith.constant 0 : i32
    return %c0_i32, %c0_i32_0 : i32, i32
  }
  func.func @transform_2(%arg0: i32) -> (i32, i32) {
    %c0_i32 = arith.constant 0 : i32
    %c0_i32_0 = arith.constant 0 : i32
    return %arg0, %c0_i32 : i32, i32
  }
}

</mosaic_0001>

<llo_original>
// kernel: tpu_custom_call.1
$region0: #{tpu_custom_call.1}
  #allocation0 [shape = 'u32[]', space=smem, size = 0x4, offset = 0x4, fixed_abs, tag = 'smem constant byte address 0x4 - core index']
  #allocation1 [shape = 'u32[72,128]{1,0:T(1,128)}', space=vmem, size = 0x9000, scoped, tag = 'internal scratch']
  %s0 = inlined_call_operand.vmem [shape: s32[8,1], index: 0, kind: input, shape index: {}]
  %s1 = inlined_call_operand.hbm [shape: f32[16,128], index: 1, kind: input, shape index: {}]
  %s2 = inlined_call_operand.hbm [shape: f32[8,128], index: 2, kind: output, shape index: {}]
  %s3 = sld [smem:[#allocation0]]
  $region22: #{tpu_custom_call.1} parent=0
    _
  %s5 = ssub.s32 1, %s3
  %s6 = scalar_select 0, %s5, %s3
  $region1: #{tpu_custom_call.1} parent=0
    #allocation2 [shape = 'u8[8192]{0}', space=vmem, size = 0x2000, scoped, tag = 'input window, operand 1, single buffered']
    #allocation3 [shape = 's32[1]{0}', space=sflag, size = 0x4, scoped, tag = 'scoped memory for tpu_custom_call.1']
    #allocation4 [shape = 's32[1]{0}', space=sflag, size = 0x4, scoped, tag = 'scoped memory for tpu_custom_call.1']
    #allocation5 [shape = 'u8[4096]{0}', space=vmem, size = 0x1000, scoped, tag = 'output window, operand 0, single buffered']
    %7 = vsyncpa [#allocation3], 0
    %8 = vsyncpa [#allocation4], 0
    // Predicated region
    $region2: #{tpu_custom_call.1} parent=1 // pred_check
      _
    $region3: #{tpu_custom_call.1} parent=1 // pred_check_branch
      %10 = sbr.rel (0) target = $region5
    $region4: #{tpu_custom_call.1} parent=1 // pred_region
      _
    $region5: #{tpu_custom_call.1} parent=1 // pred_fallthru
      _
    // Predicated region
    $region6: #{tpu_custom_call.1} parent=1 // pred_check
      _
    $region7: #{tpu_custom_call.1} parent=1 // pred_check_branch
      %12 = sbr.rel (0) target = $region9
    $region8: #{tpu_custom_call.1} parent=1 // pred_region
      %14 = vsyncadd [#allocation3], 0
      %s15 = sshll.u32 %s1, 4
      %s16 = int_to_ptr.hbm [resolvable:$true] %s15
      %s17 = sshll.u32 [#allocation2], 4
      %s18 = int_to_ptr.vmem [resolvable:$true] %s17
      %23 = dma.hbm_to_vmem [thread:$0]  %s16, 256, %s18, [#allocation3], 128, 128, 8
    $region9: #{tpu_custom_call.1} parent=1 // pred_fallthru
      _
    // Predicated region
    $region10: #{tpu_custom_call.1} parent=1 // pred_check
      _
    $region11: #{tpu_custom_call.1} parent=1 // pred_check_branch
      %25 = sbr.rel (0) target = $region13
    $region12: #{tpu_custom_call.1} parent=1 // pred_region
      %27 = dma.done [#allocation3], 256
    $region13: #{tpu_custom_call.1} parent=1 // pred_fallthru
      _
    %v28 = vld [vmem:[%s0] sm:$0xff]
    %vm29 = vcmp.lt.s32.totalorder %v28, 16
    %v30 = vsel %vm29, %v28, 0
    %v31 = vlaneseq
    %v32 = vand.u32 %v31, 127
    %33 = vset.pattern.permute.xlu0 0
    %34 = vperm.xlu0 %33, %v30
    %v35 = vpop.permute.xlu0 %34
    %vm36 = vcmp.eq.s32.totalorder %v32, %v35
    %v37 = vsel %vm36, 1, 0
    %v38 = vcvt.s32.f32 %v37
    %v39 = vld [vmem:[#allocation2] sm:$0xff]
    %v40 = vld [vmem:[#allocation2 + $0x8] sm:$0xff]
    %vm41 = vcmask 130048
    %v43 = vsel %vm41, %v38, 0
    %45 = vmatpush.msra.mxu0 0.0
    %46 = vmatpush.msra.mxu0 0.0
    %47 = vmatpush.msra.mxu0 0.0
    %48 = vmatpush.msra.mxu0 0.0
    %49 = vmatpush.msra.mxu0 0.0
    %50 = vmatpush.msra.mxu0 0.0
    %51 = vmatpush.msra.mxu0 0.0
    %52 = vmatpush.msra.mxu0 0.0
    %53 = vmatpush.msra.mxu0 0.0
    %54 = vmatpush.msra.mxu0 0.0
    %55 = vmatpush.msra.mxu0 0.0
    %56 = vmatpush.msra.mxu0 0.0
    %57 = vmatpush.msra.mxu0 0.0
    %58 = vmatpush.msra.mxu0 0.0
    %59 = vmatpush.msra.mxu0 %v40
    %60 = vmatpush.msra.mxu0 %v39
    %61 = vmatmul.f32.gmra.mxu0 %v43
    %v62 = vpop.f32.mrf.mxu0
    %v63 = vadd.f32 0.0, %v62
    %64 = vdwg.mxu0
    %65 = vst [vmem:[#allocation5] sm:$0xff] %v63
    // Predicated region
    $region14: #{tpu_custom_call.1} parent=1 // pred_check
      _
    $region15: #{tpu_custom_call.1} parent=1 // pred_check_branch
      %67 = sbr.rel (0) target = $region17
    $region16: #{tpu_custom_call.1} parent=1 // pred_region
      %69 = vsyncadd [#allocation4], 0
      %s71 = sshll.u32 [#allocation5], 4
      %s72 = int_to_ptr.vmem [resolvable:$true] %s71
      %s73 = sshll.u32 %s2, 4
      %s74 = int_to_ptr.hbm [resolvable:$true] %s73
      %76 = dma.vmem_to_hbm [thread:$0]  %s72, 128, %s74, [#allocation4]
    $region17: #{tpu_custom_call.1} parent=1 // pred_fallthru
      _
    // Predicated region
    $region18: #{tpu_custom_call.1} parent=1 // pred_check
      _
    $region19: #{tpu_custom_call.1} parent=1 // pred_check_branch
      %78 = sbr.rel (0) target = $region21
    $region20: #{tpu_custom_call.1} parent=1 // pred_region
      %80 = dma.done [#allocation4], 128
    $region21: #{tpu_custom_call.1} parent=1 // pred_fallthru
      _
    %81 = vsyncpa [#allocation3], 1
    %82 = vsyncpa [#allocation4], 1

</llo_original>
